<compile_context>
chip_gen: v5e
topology: v5e:2x2
jax: 0.10.0
libtpu: 0.0.40
codegen_flags: <defaults>
</compile_context>

<pallas_src>
import numpy as np
import jax
import jax.numpy as jnp
from jax import lax
from jax.experimental import pallas as pl
from jax.experimental.pallas import tpu as pltpu

H1 = 128           # hidden width used throughout the module
BN_EPS = 1e-5      # BatchNorm1d eps
COS_EPS = 1e-8     # CosineSimilarity eps
LEAKY_SLOPE = 0.01 # LeakyReLU default negative_slope


# ----------------------------------------------------------------------------
# Pallas kernel
# ----------------------------------------------------------------------------
def aeln_kernel(xq_ref, xkv_ref, pool_ref,
                wfc1_ref, bfc1_ref, wfc2_ref, bfc2_ref,
                wp1_ref, bp1_ref, wp2_ref, bp2_ref,
                out_ref):
    f32 = jnp.float32
    bf16 = jnp.bfloat16

    B = xkv_ref.shape[0]            # full batch (key/value side)
    TB = xq_ref.shape[0]            # query-row tile
    D = xkv_ref.shape[1] // 2       # per-branch feature width

    # ---- resident full-batch key/value side --------------------------------
    x1_kv = xkv_ref[:, :D]                                   # (B, D) f32
    x2_kv = xkv_ref[:, D:]                                   # (B, D) f32
    xs_kv = jnp.concatenate([x1_kv, x2_kv], axis=0)          # (2B, D) stacked

    # Mf = fc(Xi), both branches at once (BN folded into wfc2/bfc2,
    # Dropout is identity in eval).
    z = jnp.dot(xs_kv.astype(bf16), wfc1_ref[...],
                preferred_element_type=f32) + bfc1_ref[...]
    z = jnp.maximum(z, 0.0)                                  # ReLU
    mf = jnp.dot(z.astype(bf16), wfc2_ref[...],
                 preferred_element_type=f32) + bfc2_ref[...]  # (2B, 128) f32
    mf1 = mf[:B]
    mf2 = mf[B:]

    # ---- query-row tile -----------------------------------------------------
    x1_q = xq_ref[:, :D]                                     # (TB, D)
    x2_q = xq_ref[:, D:]
    xs_q = jnp.concatenate([x1_q, x2_q], axis=0)             # (2TB, D)

    # Gf = AdaptiveAvgPool1d(128)(Xi) expressed as a matmul with a constant
    # (D, 128) pooling matrix; both branches stacked.
    gf = jnp.dot(xs_q.astype(bf16), pool_ref[...],
                 preferred_element_type=f32)                  # (2TB, 128) f32
    gf1 = gf[:TB]
    gf2 = gf[TB:]

    def attend(gf_i, mf_i, x_kv_i):
        # S = Gf @ Mf.T, softmax over the *full* batch (key) axis.
        s = lax.dot_general(gf_i, mf_i, (((1,), (1,)), ((), ())),
                            preferred_element_type=f32)       # (TB, B) f32
        s = s - jnp.max(s, axis=1, keepdims=True)
        e = jnp.exp(s)
        inv = pl.reciprocal(jnp.sum(e, axis=1, keepdims=True), approx=True)
        wg = e * inv
        # WGX = WG @ Xi   (values = full batch, f32)
        return jnp.dot(wg, x_kv_i, preferred_element_type=f32)  # (TB, D)

    wgx1 = attend(gf1, mf1, x1_kv)
    wgx2 = attend(gf2, mf2, x2_kv)
    wgx = jnp.concatenate([wgx1, wgx2], axis=0)               # (2TB, D) f32

    # parser(WGX), both branches stacked (BN folded into wp2/bp2).
    z = jnp.dot(wgx.astype(bf16), wp1_ref[...],
                preferred_element_type=f32) + bp1_ref[...]
    z = jnp.where(z >= 0.0, z, LEAKY_SLOPE * z)               # LeakyReLU
    h = jnp.dot(z.astype(bf16), wp2_ref[...],
                preferred_element_type=f32) + bp2_ref[...]     # (2TB, 128)
    h1 = h[:TB]
    h2 = h[TB:]

    # cosine similarity with PyTorch-style per-norm clamp, on the EUP:
    #   cos = <h1,h2> / (max(||h1||, eps) * max(||h2||, eps))
    d12 = jnp.sum(h1 * h2, axis=1, keepdims=True)             # (TB, 1)
    n1sq = jnp.sum(h1 * h1, axis=1, keepdims=True)
    n2sq = jnp.sum(h2 * h2, axis=1, keepdims=True)
    inv1 = lax.rsqrt(jnp.maximum(n1sq, COS_EPS * COS_EPS))
    inv2 = lax.rsqrt(jnp.maximum(n2sq, COS_EPS * COS_EPS))
    p = (d12 * inv1 * inv2 + 1.0) * 0.5                       # (TB, 1)

    # Lane-dense unmasked store: broadcast across the 128-lane axis; the
    # wrapper reads column 0.
    out_ref[...] = jnp.broadcast_to(p, (TB, H1))


# ----------------------------------------------------------------------------
# Parameters (mirror AELN.__init__ / model_init, eval mode, BN folded, bf16)
# ----------------------------------------------------------------------------
def adaptive_avg_pool1d_matrix(L, out_size):
    """(L, out_size) matrix M so that x @ M == AdaptiveAvgPool1d(out_size)(x)."""
    P = np.zeros((L, out_size), dtype=np.float32)
    for j in range(out_size):
        start = (j * L) // out_size
        end = -((-(j + 1) * L) // out_size)                   # ceil((j+1)*L/out)
        P[start:end, j] = 1.0 / (end - start)
    return jnp.asarray(P)


def init_params(key, input_dim, h1=H1):
    ks = jax.random.split(key, 4)

    def kaiming(k, fan_in, fan_out):
        # torch.nn.init.kaiming_normal_ default: gain=sqrt(2), mode='fan_in'
        std = float(np.sqrt(2.0 / fan_in))
        w = jax.random.normal(k, (fan_out, fan_in), dtype=jnp.float32) * std
        return w.T                                            # store as (in, out)

    def fold_bn_into_linear(w2, b2, gamma, beta, mean, var):
        # y = BN(x) @ w2 + b2 == x @ (s[:,None]*w2) + (t @ w2 + b2)
        s = gamma / jnp.sqrt(var + BN_EPS)
        t = beta - mean * s
        return w2 * s[:, None], b2 + (t[None, :] @ w2)

    # BatchNorm1d eval defaults (fresh init). For a trained model, substitute
    # the real running_mean / running_var / gamma / beta here.
    g = jnp.ones((h1,), jnp.float32)
    bt = jnp.zeros((h1,), jnp.float32)
    mu = jnp.zeros((h1,), jnp.float32)
    vr = jnp.ones((h1,), jnp.float32)

    wfc1 = kaiming(ks[0], input_dim, h1); bfc1 = jnp.zeros((1, h1), jnp.float32)
    wfc2 = kaiming(ks[1], h1, h1);        bfc2 = jnp.zeros((1, h1), jnp.float32)
    wp1 = kaiming(ks[2], input_dim, h1);  bp1 = jnp.zeros((1, h1), jnp.float32)
    wp2 = kaiming(ks[3], h1, h1);         bp2 = jnp.zeros((1, h1), jnp.float32)

    wfc2, bfc2 = fold_bn_into_linear(wfc2, bfc2, g, bt, mu, vr)
    wp2, bp2 = fold_bn_into_linear(wp2, bp2, g, bt, mu, vr)

    bf16 = jnp.bfloat16
    return dict(
        pool=adaptive_avg_pool1d_matrix(input_dim, h1).astype(bf16),
        wfc1=wfc1.astype(bf16), bfc1=bfc1,
        wfc2=wfc2.astype(bf16), bfc2=bfc2,
        wp1=wp1.astype(bf16), bp1=bp1,
        wp2=wp2.astype(bf16), bp2=bp2,
    )


# ----------------------------------------------------------------------------
# Wrapper
# ----------------------------------------------------------------------------
def _query_tile(B):
    # Whole batch for small B; otherwise a multiple of 128 that divides B
    # (the (8,128) block constraint requires TB == B or TB % 8 == 0, and the
    # lane-dense (TB,128) out block requires TB % 8 == 0).
    if B <= 256:
        return B
    for tb in (512, 256, 128):
        if B % tb == 0:
            return tb
    return B


@jax.jit
def aeln_forward(X, params):
    B, twoD = X.shape
    D = twoD // 2
    TB = _query_tile(B)
    nb = B // TB

    def const(shape):
        return pl.BlockSpec(shape, lambda i, _n=len(shape): (0,) * _n)

    in_specs = [
        pl.BlockSpec((TB, twoD), lambda i: (i, 0)),   # query-row tile of X
        const((B, twoD)),                             # full X (keys/values), resident
        const((D, H1)),                               # pool
        const((D, H1)), const((1, H1)),               # wfc1, bfc1
        const((H1, H1)), const((1, H1)),              # wfc2 (BN folded), bfc2
        const((D, H1)), const((1, H1)),               # wp1, bp1
        const((H1, H1)), const((1, H1)),              # wp2 (BN folded), bp2
    ]

    out = pl.pallas_call(
        aeln_kernel,
        grid=(nb,),
        in_specs=in_specs,
        out_specs=pl.BlockSpec((TB, H1), lambda i: (i, 0)),
        out_shape=jax.ShapeDtypeStruct((B, H1), jnp.float32),
        compiler_params=pltpu.CompilerParams(
            dimension_semantics=("parallel",),
            vmem_limit_bytes=32 * 1024 * 1024),
    )(X, X,
      params["pool"],
      params["wfc1"], params["bfc1"], params["wfc2"], params["bfc2"],
      params["wp1"], params["bp1"], params["wp2"], params["bp2"])
    return out[:, 0]


# ----------------------------------------------------------------------------
# Pure-JAX reference (same eval-mode math / same bf16-at-MXU precision regime)
# ----------------------------------------------------------------------------
def reference_forward(X, params):
    bf16, f32 = jnp.bfloat16, jnp.float32
    D = params["wfc1"].shape[0]
    X1, X2 = X[:, :D], X[:, D:]

    def branch(Xi):
        xb = Xi.astype(bf16)
        z = jnp.dot(xb, params["wfc1"], preferred_element_type=f32) + params["bfc1"]
        z = jnp.maximum(z, 0.0)
        Mf = jnp.dot(z.astype(bf16), params["wfc2"],
                     preferred_element_type=f32) + params["bfc2"]
        Gf = jnp.dot(xb, params["pool"], preferred_element_type=f32)
        S = lax.dot_general(Gf, Mf, (((1,), (1,)), ((), ())),
                            preferred_element_type=f32)
        WG = jax.nn.softmax(S, axis=1)
        WGX = jnp.dot(WG, Xi, preferred_element_type=f32)
        z = jnp.dot(WGX.astype(bf16), params["wp1"],
                    preferred_element_type=f32) + params["bp1"]
        z = jnp.where(z >= 0.0, z, LEAKY_SLOPE * z)
        return jnp.dot(z.astype(bf16), params["wp2"],
                       preferred_element_type=f32) + params["bp2"]

    h1, h2 = branch(X1), branch(X2)
    d12 = jnp.sum(h1 * h2, axis=1)
    n1 = jnp.sqrt(jnp.sum(h1 * h1, axis=1))
    n2 = jnp.sqrt(jnp.sum(h2 * h2, axis=1))
    cos = d12 / (jnp.maximum(n1, COS_EPS) * jnp.maximum(n2, COS_EPS))
    return (cos + 1.0) * 0.5


if __name__ == "__main__":
    B, INPUT_DIM = 8, 32                       # X has 2*input_dim columns
    key = jax.random.PRNGKey(0)
    kx, kp = jax.random.split(key)
    X = jax.random.normal(kx, (B, 2 * INPUT_DIM), dtype=jnp.float32)
    params = init_params(kp, INPUT_DIM)

    p = aeln_forward(X, params)
    p = jax.block_until_ready(p)

    p_ref = reference_forward(X, params)
    # Tolerance driver: approx EUP reciprocal in the in-kernel softmax
    # normalization (the bf16 MXU path is mirrored in the reference).
    np.testing.assert_allclose(np.asarray(p), np.asarray(p_ref),
                               rtol=2e-2, atol=5e-3)
    assert p.shape == (B,)
    print("KERNEL_OK")
</pallas_src>

<mosaic_0001>
module attributes {stable_mosaic.version = 11 : i64} {
  func.func @aeln_kernel(%arg0: i32, %arg1: memref<8x64xf32, #tpu.memory_space<vmem>>, %arg2: memref<8x64xf32, #tpu.memory_space<vmem>>, %arg3: memref<32x128xbf16, #tpu.memory_space<vmem>>, %arg4: memref<32x128xbf16, #tpu.memory_space<vmem>>, %arg5: memref<1x128xf32, #tpu.memory_space<vmem>>, %arg6: memref<128x128xbf16, #tpu.memory_space<vmem>>, %arg7: memref<1x128xf32, #tpu.memory_space<vmem>>, %arg8: memref<32x128xbf16, #tpu.memory_space<vmem>>, %arg9: memref<1x128xf32, #tpu.memory_space<vmem>>, %arg10: memref<128x128xbf16, #tpu.memory_space<vmem>>, %arg11: memref<1x128xf32, #tpu.memory_space<vmem>>, %arg12: memref<8x128xf32, #tpu.memory_space<vmem>>) attributes {dimension_semantics = [#tpu.dimension_semantics<parallel>], iteration_bounds = array<i64: 1>, scalar_prefetch = 0 : i64, scratch_operands = 0 : i64, tpu.core_type = #tpu.core_type<tc>, window_params = [{transform_indices = @transform_0, window_bounds = array<i64: 8, 64>}, {pipeline_mode = #tpu.pipeline_mode<synchronous>, transform_indices = @transform_1, window_bounds = array<i64: 8, 64>}, {pipeline_mode = #tpu.pipeline_mode<synchronous>, transform_indices = @transform_2, window_bounds = array<i64: 32, 128>}, {pipeline_mode = #tpu.pipeline_mode<synchronous>, transform_indices = @transform_3, window_bounds = array<i64: 32, 128>}, {pipeline_mode = #tpu.pipeline_mode<synchronous>, transform_indices = @transform_4, window_bounds = array<i64: 1, 128>}, {pipeline_mode = #tpu.pipeline_mode<synchronous>, transform_indices = @transform_5, window_bounds = array<i64: 128, 128>}, {pipeline_mode = #tpu.pipeline_mode<synchronous>, transform_indices = @transform_6, window_bounds = array<i64: 1, 128>}, {pipeline_mode = #tpu.pipeline_mode<synchronous>, transform_indices = @transform_7, window_bounds = array<i64: 32, 128>}, {pipeline_mode = #tpu.pipeline_mode<synchronous>, transform_indices = @transform_8, window_bounds = array<i64: 1, 128>}, {pipeline_mode = #tpu.pipeline_mode<synchronous>, transform_indices = @transform_9, window_bounds = array<i64: 128, 128>}, {pipeline_mode = #tpu.pipeline_mode<synchronous>, transform_indices = @transform_10, window_bounds = array<i64: 1, 128>}, {transform_indices = @transform_11, window_bounds = array<i64: 8, 128>}]} {
    %c0 = arith.constant 0 : index
    %c0_0 = arith.constant 0 : index
    %0 = vector.load %arg2[%c0, %c0_0] : memref<8x64xf32, #tpu.memory_space<vmem>>, vector<8x32xf32>
    %c0_1 = arith.constant 0 : index
    %c32 = arith.constant 32 : index
    %1 = vector.load %arg2[%c0_1, %c32] : memref<8x64xf32, #tpu.memory_space<vmem>>, vector<8x32xf32>
    %2 = tpu.concatenate %0, %1 in 0 : vector<8x32xf32>, vector<8x32xf32> -> vector<16x32xf32>
    %3 = arith.truncf %2 : vector<16x32xf32> to vector<16x32xbf16>
    %c0_2 = arith.constant 0 : index
    %c0_3 = arith.constant 0 : index
    %4 = vector.load %arg4[%c0_2, %c0_3] : memref<32x128xbf16, #tpu.memory_space<vmem>>, vector<32x128xbf16>
    %cst = arith.constant dense<0.000000e+00> : vector<16x128xf32>
    %5 = tpu.matmul %3, %4, %cst {dimension_numbers = #tpu.dot_dimension_numbers<[1], [0], [0], [1], [0, 0, 1, 1], [], []>} : vector<16x32xbf16>, vector<32x128xbf16>, vector<16x128xf32> -> vector<16x128xf32>
    %c0_4 = arith.constant 0 : index
    %c0_5 = arith.constant 0 : index
    %6 = vector.load %arg5[%c0_4, %c0_5] : memref<1x128xf32, #tpu.memory_space<vmem>>, vector<1x128xf32>
    %7 = vector.broadcast %6 : vector<1x128xf32> to vector<16x128xf32>
    %8 = arith.addf %5, %7 : vector<16x128xf32>
    %cst_6 = arith.constant 0.000000e+00 : f32
    %9 = vector.broadcast %cst_6 : f32 to vector<16x128xf32>
    %10 = arith.maximumf %8, %9 : vector<16x128xf32>
    %11 = arith.truncf %10 : vector<16x128xf32> to vector<16x128xbf16>
    %c0_7 = arith.constant 0 : index
    %c0_8 = arith.constant 0 : index
    %12 = vector.load %arg6[%c0_7, %c0_8] : memref<128x128xbf16, #tpu.memory_space<vmem>>, vector<128x128xbf16>
    %cst_9 = arith.constant dense<0.000000e+00> : vector<16x128xf32>
    %13 = tpu.matmul %11, %12, %cst_9 {dimension_numbers = #tpu.dot_dimension_numbers<[1], [0], [0], [1], [0, 0, 1, 1], [], []>} : vector<16x128xbf16>, vector<128x128xbf16>, vector<16x128xf32> -> vector<16x128xf32>
    %c0_10 = arith.constant 0 : index
    %c0_11 = arith.constant 0 : index
    %14 = vector.load %arg7[%c0_10, %c0_11] : memref<1x128xf32, #tpu.memory_space<vmem>>, vector<1x128xf32>
    %15 = vector.broadcast %14 : vector<1x128xf32> to vector<16x128xf32>
    %16 = arith.addf %13, %15 : vector<16x128xf32>
    %17 = vector.extract_strided_slice %16 {offsets = [0, 0], sizes = [8, 128], strides = [1, 1]} : vector<16x128xf32> to vector<8x128xf32>
    %18 = vector.extract_strided_slice %16 {offsets = [8, 0], sizes = [8, 128], strides = [1, 1]} : vector<16x128xf32> to vector<8x128xf32>
    %c0_12 = arith.constant 0 : index
    %c0_13 = arith.constant 0 : index
    %19 = vector.load %arg1[%c0_12, %c0_13] : memref<8x64xf32, #tpu.memory_space<vmem>>, vector<8x32xf32>
    %c0_14 = arith.constant 0 : index
    %c32_15 = arith.constant 32 : index
    %20 = vector.load %arg1[%c0_14, %c32_15] : memref<8x64xf32, #tpu.memory_space<vmem>>, vector<8x32xf32>
    %21 = tpu.concatenate %19, %20 in 0 : vector<8x32xf32>, vector<8x32xf32> -> vector<16x32xf32>
    %22 = arith.truncf %21 : vector<16x32xf32> to vector<16x32xbf16>
    %c0_16 = arith.constant 0 : index
    %c0_17 = arith.constant 0 : index
    %23 = vector.load %arg3[%c0_16, %c0_17] : memref<32x128xbf16, #tpu.memory_space<vmem>>, vector<32x128xbf16>
    %cst_18 = arith.constant dense<0.000000e+00> : vector<16x128xf32>
    %24 = tpu.matmul %22, %23, %cst_18 {dimension_numbers = #tpu.dot_dimension_numbers<[1], [0], [0], [1], [0, 0, 1, 1], [], []>} : vector<16x32xbf16>, vector<32x128xbf16>, vector<16x128xf32> -> vector<16x128xf32>
    %25 = vector.extract_strided_slice %24 {offsets = [0, 0], sizes = [8, 128], strides = [1, 1]} : vector<16x128xf32> to vector<8x128xf32>
    %26 = vector.extract_strided_slice %24 {offsets = [8, 0], sizes = [8, 128], strides = [1, 1]} : vector<16x128xf32> to vector<8x128xf32>
    %cst_19 = arith.constant dense<0.000000e+00> : vector<8x8xf32>
    %27 = tpu.matmul %25, %17, %cst_19 {dimension_numbers = #tpu.dot_dimension_numbers<[1], [1], [0], [0], [0, 0, 1, 0], [], []>} : vector<8x128xf32>, vector<8x128xf32>, vector<8x8xf32> -> vector<8x8xf32>
    %cst_20 = arith.constant dense<0xFF800000> : vector<8xf32>
    %28 = vector.multi_reduction <maximumf>, %27, %cst_20 [1] : vector<8x8xf32> to vector<8xf32>
    %29 = vector.shape_cast %28 : vector<8xf32> to vector<8x1xf32>
    %30 = vector.broadcast %29 : vector<8x1xf32> to vector<8x8xf32>
    %31 = arith.subf %27, %30 : vector<8x8xf32>
    %32 = math.exp %31 : vector<8x8xf32>
    %cst_21 = arith.constant dense<0.000000e+00> : vector<8xf32>
    %33 = vector.multi_reduction <add>, %32, %cst_21 [1] : vector<8x8xf32> to vector<8xf32>
    %34 = vector.shape_cast %33 : vector<8xf32> to vector<8x1xf32>
    %35 = tpu.reciprocal %34 {approx = true} : vector<8x1xf32> -> vector<8x1xf32>
    %36 = vector.broadcast %35 : vector<8x1xf32> to vector<8x8xf32>
    %37 = arith.mulf %32, %36 : vector<8x8xf32>
    %cst_22 = arith.constant dense<0.000000e+00> : vector<8x32xf32>
    %38 = tpu.matmul %37, %0, %cst_22 {dimension_numbers = #tpu.dot_dimension_numbers<[1], [0], [0], [1], [0, 0, 1, 1], [], []>} : vector<8x8xf32>, vector<8x32xf32>, vector<8x32xf32> -> vector<8x32xf32>
    %cst_23 = arith.constant dense<0.000000e+00> : vector<8x8xf32>
    %39 = tpu.matmul %26, %18, %cst_23 {dimension_numbers = #tpu.dot_dimension_numbers<[1], [1], [0], [0], [0, 0, 1, 0], [], []>} : vector<8x128xf32>, vector<8x128xf32>, vector<8x8xf32> -> vector<8x8xf32>
    %cst_24 = arith.constant dense<0xFF800000> : vector<8xf32>
    %40 = vector.multi_reduction <maximumf>, %39, %cst_24 [1] : vector<8x8xf32> to vector<8xf32>
    %41 = vector.shape_cast %40 : vector<8xf32> to vector<8x1xf32>
    %42 = vector.broadcast %41 : vector<8x1xf32> to vector<8x8xf32>
    %43 = arith.subf %39, %42 : vector<8x8xf32>
    %44 = math.exp %43 : vector<8x8xf32>
    %cst_25 = arith.constant dense<0.000000e+00> : vector<8xf32>
    %45 = vector.multi_reduction <add>, %44, %cst_25 [1] : vector<8x8xf32> to vector<8xf32>
    %46 = vector.shape_cast %45 : vector<8xf32> to vector<8x1xf32>
    %47 = tpu.reciprocal %46 {approx = true} : vector<8x1xf32> -> vector<8x1xf32>
    %48 = vector.broadcast %47 : vector<8x1xf32> to vector<8x8xf32>
    %49 = arith.mulf %44, %48 : vector<8x8xf32>
    %cst_26 = arith.constant dense<0.000000e+00> : vector<8x32xf32>
    %50 = tpu.matmul %49, %1, %cst_26 {dimension_numbers = #tpu.dot_dimension_numbers<[1], [0], [0], [1], [0, 0, 1, 1], [], []>} : vector<8x8xf32>, vector<8x32xf32>, vector<8x32xf32> -> vector<8x32xf32>
    %51 = tpu.concatenate %38, %50 in 0 : vector<8x32xf32>, vector<8x32xf32> -> vector<16x32xf32>
    %52 = arith.truncf %51 : vector<16x32xf32> to vector<16x32xbf16>
    %c0_27 = arith.constant 0 : index
    %c0_28 = arith.constant 0 : index
    %53 = vector.load %arg8[%c0_27, %c0_28] : memref<32x128xbf16, #tpu.memory_space<vmem>>, vector<32x128xbf16>
    %cst_29 = arith.constant dense<0.000000e+00> : vector<16x128xf32>
    %54 = tpu.matmul %52, %53, %cst_29 {dimension_numbers = #tpu.dot_dimension_numbers<[1], [0], [0], [1], [0, 0, 1, 1], [], []>} : vector<16x32xbf16>, vector<32x128xbf16>, vector<16x128xf32> -> vector<16x128xf32>
    %c0_30 = arith.constant 0 : index
    %c0_31 = arith.constant 0 : index
    %55 = vector.load %arg9[%c0_30, %c0_31] : memref<1x128xf32, #tpu.memory_space<vmem>>, vector<1x128xf32>
    %56 = vector.broadcast %55 : vector<1x128xf32> to vector<16x128xf32>
    %57 = arith.addf %54, %56 : vector<16x128xf32>
    %cst_32 = arith.constant 0.000000e+00 : f32
    %58 = vector.broadcast %cst_32 : f32 to vector<16x128xf32>
    %59 = arith.cmpf oge, %57, %58 : vector<16x128xf32>
    %cst_33 = arith.constant 0.00999999977 : f32
    %60 = vector.broadcast %cst_33 : f32 to vector<16x128xf32>
    %61 = arith.mulf %60, %57 : vector<16x128xf32>
    %62 = arith.select %59, %57, %61 : vector<16x128xi1>, vector<16x128xf32>
    %63 = arith.truncf %62 : vector<16x128xf32> to vector<16x128xbf16>
    %c0_34 = arith.constant 0 : index
    %c0_35 = arith.constant 0 : index
    %64 = vector.load %arg10[%c0_34, %c0_35] : memref<128x128xbf16, #tpu.memory_space<vmem>>, vector<128x128xbf16>
    %cst_36 = arith.constant dense<0.000000e+00> : vector<16x128xf32>
    %65 = tpu.matmul %63, %64, %cst_36 {dimension_numbers = #tpu.dot_dimension_numbers<[1], [0], [0], [1], [0, 0, 1, 1], [], []>} : vector<16x128xbf16>, vector<128x128xbf16>, vector<16x128xf32> -> vector<16x128xf32>
    %c0_37 = arith.constant 0 : index
    %c0_38 = arith.constant 0 : index
    %66 = vector.load %arg11[%c0_37, %c0_38] : memref<1x128xf32, #tpu.memory_space<vmem>>, vector<1x128xf32>
    %67 = vector.broadcast %66 : vector<1x128xf32> to vector<16x128xf32>
    %68 = arith.addf %65, %67 : vector<16x128xf32>
    %69 = vector.extract_strided_slice %68 {offsets = [0, 0], sizes = [8, 128], strides = [1, 1]} : vector<16x128xf32> to vector<8x128xf32>
    %70 = vector.extract_strided_slice %68 {offsets = [8, 0], sizes = [8, 128], strides = [1, 1]} : vector<16x128xf32> to vector<8x128xf32>
    %71 = arith.mulf %69, %70 : vector<8x128xf32>
    %cst_39 = arith.constant dense<0.000000e+00> : vector<8xf32>
    %72 = vector.multi_reduction <add>, %71, %cst_39 [1] : vector<8x128xf32> to vector<8xf32>
    %73 = vector.shape_cast %72 : vector<8xf32> to vector<8x1xf32>
    %74 = arith.mulf %69, %69 : vector<8x128xf32>
    %cst_40 = arith.constant dense<0.000000e+00> : vector<8xf32>
    %75 = vector.multi_reduction <add>, %74, %cst_40 [1] : vector<8x128xf32> to vector<8xf32>
    %76 = vector.shape_cast %75 : vector<8xf32> to vector<8x1xf32>
    %77 = arith.mulf %70, %70 : vector<8x128xf32>
    %cst_41 = arith.constant dense<0.000000e+00> : vector<8xf32>
    %78 = vector.multi_reduction <add>, %77, %cst_41 [1] : vector<8x128xf32> to vector<8xf32>
    %79 = vector.shape_cast %78 : vector<8xf32> to vector<8x1xf32>
    %cst_42 = arith.constant 1.000000e-16 : f32
    %80 = vector.broadcast %cst_42 : f32 to vector<8x1xf32>
    %81 = arith.maximumf %76, %80 : vector<8x1xf32>
    %82 = math.rsqrt %81 : vector<8x1xf32>
    %cst_43 = arith.constant 1.000000e-16 : f32
    %83 = vector.broadcast %cst_43 : f32 to vector<8x1xf32>
    %84 = arith.maximumf %79, %83 : vector<8x1xf32>
    %85 = math.rsqrt %84 : vector<8x1xf32>
    %86 = arith.mulf %73, %82 : vector<8x1xf32>
    %87 = arith.mulf %86, %85 : vector<8x1xf32>
    %cst_44 = arith.constant 1.000000e+00 : f32
    %88 = vector.broadcast %cst_44 : f32 to vector<8x1xf32>
    %89 = arith.addf %87, %88 : vector<8x1xf32>
    %cst_45 = arith.constant 5.000000e-01 : f32
    %90 = vector.broadcast %cst_45 : f32 to vector<8x1xf32>
    %91 = arith.mulf %89, %90 : vector<8x1xf32>
    %92 = vector.shape_cast %91 : vector<8x1xf32> to vector<8x1xf32>
    %93 = vector.broadcast %92 : vector<8x1xf32> to vector<8x128xf32>
    %c0_46 = arith.constant 0 : index
    %c0_47 = arith.constant 0 : index
    %94 = vector.load %arg12[%c0_46, %c0_47] : memref<8x128xf32, #tpu.memory_space<vmem>>, vector<8x128xf32>
    tpu.vector_store %arg12[%c0_46, %c0_47], %93 {strides = array<i32>} : memref<8x128xf32, #tpu.memory_space<vmem>>, vector<8x128xf32>,
    return
  }
  func.func @transform_0(%arg0: i32) -> (i32, i32) {
    %c0_i32 = arith.constant 0 : i32
    %c0_i32_0 = arith.constant 0 : i32
    return %arg0, %c0_i32 : i32, i32
  }
  func.func @transform_1(%arg0: i32) -> (i32, i32) {
    %c0_i32 = arith.constant 0 : i32
    %c0_i32_0 = arith.constant 0 : i32
    %c0_i32_1 = arith.constant 0 : i32
    return %c0_i32, %c0_i32_0 : i32, i32
  }
  func.func @transform_2(%arg0: i32) -> (i32, i32) {
    %c0_i32 = arith.constant 0 : i32
    %c0_i32_0 = arith.constant 0 : i32
    %c0_i32_1 = arith.constant 0 : i32
    return %c0_i32, %c0_i32_0 : i32, i32
  }
  func.func @transform_3(%arg0: i32) -> (i32, i32) {
    %c0_i32 = arith.constant 0 : i32
    %c0_i32_0 = arith.constant 0 : i32
    %c0_i32_1 = arith.constant 0 : i32
    return %c0_i32, %c0_i32_0 : i32, i32
  }
  func.func @transform_4(%arg0: i32) -> (i32, i32) {
    %c0_i32 = arith.constant 0 : i32
    %c0_i32_0 = arith.constant 0 : i32
    %c0_i32_1 = arith.constant 0 : i32
    return %c0_i32, %c0_i32_0 : i32, i32
  }
  func.func @transform_5(%arg0: i32) -> (i32, i32) {
    %c0_i32 = arith.constant 0 : i32
    %c0_i32_0 = arith.constant 0 : i32
    %c0_i32_1 = arith.constant 0 : i32
    return %c0_i32, %c0_i32_0 : i32, i32
  }
  func.func @transform_6(%arg0: i32) -> (i32, i32) {
    %c0_i32 = arith.constant 0 : i32
    %c0_i32_0 = arith.constant 0 : i32
    %c0_i32_1 = arith.constant 0 : i32
    return %c0_i32, %c0_i32_0 : i32, i32
  }
  func.func @transform_7(%arg0: i32) -> (i32, i32) {
    %c0_i32 = arith.constant 0 : i32
    %c0_i32_0 = arith.constant 0 : i32
    %c0_i32_1 = arith.constant 0 : i32
    return %c0_i32, %c0_i32_0 : i32, i32
  }
  func.func @transform_8(%arg0: i32) -> (i32, i32) {
    %c0_i32 = arith.constant 0 : i32
    %c0_i32_0 = arith.constant 0 : i32
    %c0_i32_1 = arith.constant 0 : i32
    return %c0_i32, %c0_i32_0 : i32, i32
  }
  func.func @transform_9(%arg0: i32) -> (i32, i32) {
    %c0_i32 = arith.constant 0 : i32
    %c0_i32_0 = arith.constant 0 : i32
    %c0_i32_1 = arith.constant 0 : i32
    return %c0_i32, %c0_i32_0 : i32, i32
  }
  func.func @transform_10(%arg0: i32) -> (i32, i32) {
    %c0_i32 = arith.constant 0 : i32
    %c0_i32_0 = arith.constant 0 : i32
    %c0_i32_1 = arith.constant 0 : i32
    return %c0_i32, %c0_i32_0 : i32, i32
  }
  func.func @transform_11(%arg0: i32) -> (i32, i32) {
    %c0_i32 = arith.constant 0 : i32
    %c0_i32_0 = arith.constant 0 : i32
    return %arg0, %c0_i32 : i32, i32
  }
}

</mosaic_0001>

<llo_original>
// kernel: aeln_forward.1
$region0: #{aeln_forward.1}
  #allocation0 [shape = 'u32[]', space=smem, size = 0x4, offset = 0x4, fixed_abs, tag = 'smem constant byte address 0x4 - core index']
  #allocation1 [shape = 'u32[72,128]{1,0:T(1,128)}', space=vmem, size = 0x9000, scoped, tag = 'internal scratch']
  %s0 = inlined_call_operand.hbm [shape: f32[8,64], index: 0, kind: input, shape index: {}, may-alias: {0,1}]
  %s1 = inlined_call_operand.hbm [shape: f32[8,64], index: 1, kind: input, shape index: {}, may-alias: {0,1}]
  %s2 = inlined_call_operand.hbm [shape: bf16[32,128], index: 2, kind: input, shape index: {}]
  %s3 = inlined_call_operand.hbm [shape: bf16[32,128], index: 3, kind: input, shape index: {}]
  %s4 = inlined_call_operand.hbm [shape: f32[1,128], index: 4, kind: input, shape index: {}]
  %s5 = inlined_call_operand.hbm [shape: bf16[128,128], index: 5, kind: input, shape index: {}]
  %s6 = inlined_call_operand.vmem [shape: f32[1,128], index: 6, kind: input, shape index: {}]
  %s7 = inlined_call_operand.hbm [shape: bf16[32,128], index: 7, kind: input, shape index: {}]
  %s8 = inlined_call_operand.vmem [shape: f32[1,128], index: 8, kind: input, shape index: {}]
  %s9 = inlined_call_operand.hbm [shape: bf16[128,128], index: 9, kind: input, shape index: {}]
  %s10 = inlined_call_operand.vmem [shape: f32[1,128], index: 10, kind: input, shape index: {}]
  %s11 = inlined_call_operand.vmem [shape: f32[8,128], index: 11, kind: output, shape index: {}]
  %s12 = sld [smem:[#allocation0]]
  $region86: #{aeln_forward.1} parent=0
    _
  %s14 = ssub.s32 1, %s12
  %s15 = scalar_select 0, %s14, %s12
  $region1: #{aeln_forward.1} parent=0
    #allocation2 [shape = 'u8[4096]{0}', space=vmem, size = 0x1000, scoped, tag = 'input window, operand 0, single buffered']
    #allocation3 [shape = 's32[1]{0}', space=sflag, size = 0x4, scoped, tag = 'scoped memory for aeln_forward.1']
    #allocation4 [shape = 'u8[4096]{0}', space=vmem, size = 0x1000, scoped, tag = 'input window, operand 1, single buffered']
    #allocation5 [shape = 's32[1]{0}', space=sflag, size = 0x4, scoped, tag = 'scoped memory for aeln_forward.1']
    #allocation6 [shape = 'u8[8192]{0}', space=vmem, size = 0x2000, scoped, tag = 'input window, operand 2, single buffered']
    #allocation7 [shape = 'u8[8192]{0}', space=vmem, size = 0x2000, scoped, tag = 'input window, operand 3, single buffered']
    #allocation8 [shape = 's32[1]{0}', space=sflag, size = 0x4, scoped, tag = 'scoped memory for aeln_forward.1']
    #allocation9 [shape = 'u8[512]{0}', space=vmem, size = 0x400, scoped, tag = 'input window, operand 4, single buffered']
    #allocation10 [shape = 'u8[32768]{0}', space=vmem, size = 0x8000, scoped, tag = 'input window, operand 5, single buffered']
    #allocation11 [shape = 's32[1]{0}', space=sflag, size = 0x4, scoped, tag = 'scoped memory for aeln_forward.1']
    #allocation12 [shape = 'u8[8192]{0}', space=vmem, size = 0x2000, scoped, tag = 'input window, operand 7, single buffered']
    #allocation13 [shape = 'u8[32768]{0}', space=vmem, size = 0x8000, scoped, tag = 'input window, operand 9, single buffered']
    #allocation14 [shape = 's32[1]{0}', space=sflag, size = 0x4, scoped, tag = 'scoped memory for aeln_forward.1']
    %16 = vsyncpa [#allocation3], 0
    %17 = vsyncpa [#allocation5], 0
    %18 = vsyncpa [#allocation8], 0
    %19 = vsyncpa [#allocation11], 0
    %20 = vsyncpa [#allocation14], 0
    // Predicated region
    $region2: #{aeln_forward.1} parent=1 // pred_check
      _
    $region3: #{aeln_forward.1} parent=1 // pred_check_branch
      %22 = sbr.rel (0) target = $region5
    $region4: #{aeln_forward.1} parent=1 // pred_region
      %24 = vsyncadd [#allocation3], 0
      %s26 = sshll.u32 %s0, 4
      %s27 = int_to_ptr.hbm [resolvable:$true] %s26
      %s28 = sshll.u32 [#allocation2], 4
      %s29 = int_to_ptr.vmem [resolvable:$true] %s28
      %31 = dma.hbm_to_vmem [thread:$0]  %s27, 128, %s29, [#allocation3]
    $region5: #{aeln_forward.1} parent=1 // pred_fallthru
      _
    // Predicated region
    $region6: #{aeln_forward.1} parent=1 // pred_check
      _
    $region7: #{aeln_forward.1} parent=1 // pred_check_branch
      %33 = sbr.rel (0) target = $region9
    $region8: #{aeln_forward.1} parent=1 // pred_region
      %35 = vsyncadd [#allocation5], 0
      %s37 = sshll.u32 %s1, 4
      %s38 = int_to_ptr.hbm [resolvable:$true] %s37
      %s39 = sshll.u32 [#allocation4], 4
      %s40 = int_to_ptr.vmem [resolvable:$true] %s39
      %42 = dma.hbm_to_vmem [thread:$0]  %s38, 128, %s40, [#allocation5]
    $region9: #{aeln_forward.1} parent=1 // pred_fallthru
      _
    // Predicated region
    $region10: #{aeln_forward.1} parent=1 // pred_check
      _
    $region11: #{aeln_forward.1} parent=1 // pred_check_branch
      %44 = sbr.rel (0) target = $region13
    $region12: #{aeln_forward.1} parent=1 // pred_region
      %46 = vsyncadd [#allocation5], 0
      %s47 = sshll.u32 %s2, 4
      %s48 = int_to_ptr.hbm [resolvable:$true] %s47
      %s49 = sshll.u32 [#allocation6], 4
      %s50 = int_to_ptr.vmem [resolvable:$true] %s49
      %55 = dma.hbm_to_vmem [thread:$0]  %s48, 256, %s50, [#allocation5], 64, 64, 4
    $region13: #{aeln_forward.1} parent=1 // pred_fallthru
      _
    // Predicated region
    $region14: #{aeln_forward.1} parent=1 // pred_check
      _
    $region15: #{aeln_forward.1} parent=1 // pred_check_branch
      %57 = sbr.rel (0) target = $region17
    $region16: #{aeln_forward.1} parent=1 // pred_region
      %59 = vsyncadd [#allocation8], 0
      %s60 = sshll.u32 %s3, 4
      %s61 = int_to_ptr.hbm [resolvable:$true] %s60
      %s62 = sshll.u32 [#allocation7], 4
      %s63 = int_to_ptr.vmem [resolvable:$true] %s62
      %68 = dma.hbm_to_vmem [thread:$0]  %s61, 256, %s63, [#allocation8], 64, 64, 4
    $region17: #{aeln_forward.1} parent=1 // pred_fallthru
      _
    // Predicated region
    $region18: #{aeln_forward.1} parent=1 // pred_check
      _
    $region19: #{aeln_forward.1} parent=1 // pred_check_branch
      %70 = sbr.rel (0) target = $region21
    $region20: #{aeln_forward.1} parent=1 // pred_region
      %72 = vsyncadd [#allocation8], 0
      %s74 = sshll.u32 %s4, 4
      %s75 = int_to_ptr.hbm [resolvable:$true] %s74
      %s76 = sshll.u32 [#allocation9], 4
      %s77 = int_to_ptr.vmem [resolvable:$true] %s76
      %79 = dma.hbm_to_vmem [thread:$0]  %s75, 16, %s77, [#allocation8]
    $region21: #{aeln_forward.1} parent=1 // pred_fallthru
      _
    // Predicated region
    $region22: #{aeln_forward.1} parent=1 // pred_check
      _
    $region23: #{aeln_forward.1} parent=1 // pred_check_branch
      %81 = sbr.rel (0) target = $region25
    $region24: #{aeln_forward.1} parent=1 // pred_region
      %83 = vsyncadd [#allocation11], 0
      %s84 = sshll.u32 %s5, 4
      %s85 = int_to_ptr.hbm [resolvable:$true] %s84
      %s86 = sshll.u32 [#allocation10], 4
      %s87 = int_to_ptr.vmem [resolvable:$true] %s86
      %92 = dma.hbm_to_vmem [thread:$0]  %s85, 1024, %s87, [#allocation11], 64, 64, 4
    $region25: #{aeln_forward.1} parent=1 // pred_fallthru
      _
    // Predicated region
    $region26: #{aeln_forward.1} parent=1 // pred_check
      _
    $region27: #{aeln_forward.1} parent=1 // pred_check_branch
      %94 = sbr.rel (0) target = $region29
    $region28: #{aeln_forward.1} parent=1 // pred_region
      _
    $region29: #{aeln_forward.1} parent=1 // pred_fallthru
      _
    // Predicated region
    $region30: #{aeln_forward.1} parent=1 // pred_check
      _
    $region31: #{aeln_forward.1} parent=1 // pred_check_branch
      %96 = sbr.rel (0) target = $region33
    $region32: #{aeln_forward.1} parent=1 // pred_region
      %98 = vsyncadd [#allocation11], 0
      %s99 = sshll.u32 %s7, 4
      %s100 = int_to_ptr.hbm [resolvable:$true] %s99
      %s101 = sshll.u32 [#allocation12], 4
      %s102 = int_to_ptr.vmem [resolvable:$true] %s101
      %107 = dma.hbm_to_vmem [thread:$0]  %s100, 256, %s102, [#allocation11], 64, 64, 4
    $region33: #{aeln_forward.1} parent=1 // pred_fallthru
      _
    // Predicated region
    $region34: #{aeln_forward.1} parent=1 // pred_check
      _
    $region35: #{aeln_forward.1} parent=1 // pred_check_branch
      %109 = sbr.rel (0) target = $region37
    $region36: #{aeln_forward.1} parent=1 // pred_region
      _
    $region37: #{aeln_forward.1} parent=1 // pred_fallthru
      _
    // Predicated region
    $region38: #{aeln_forward.1} parent=1 // pred_check
      _
    $region39: #{aeln_forward.1} parent=1 // pred_check_branch
      %111 = sbr.rel (0) target = $region41
    $region40: #{aeln_forward.1} parent=1 // pred_region
      %113 = vsyncadd [#allocation14], 0
      %s114 = sshll.u32 %s9, 4
      %s115 = int_to_ptr.hbm [resolvable:$true] %s114
      %s116 = sshll.u32 [#allocation13], 4
      %s117 = int_to_ptr.vmem [resolvable:$true] %s116
      %122 = dma.hbm_to_vmem [thread:$0]  %s115, 1024, %s117, [#allocation14], 64, 64, 4
    $region41: #{aeln_forward.1} parent=1 // pred_fallthru
      _
    // Predicated region
    $region42: #{aeln_forward.1} parent=1 // pred_check
      _
    $region43: #{aeln_forward.1} parent=1 // pred_check_branch
      %124 = sbr.rel (0) target = $region45
    $region44: #{aeln_forward.1} parent=1 // pred_region
      _
    $region45: #{aeln_forward.1} parent=1 // pred_fallthru
      _
    // Predicated region
    $region46: #{aeln_forward.1} parent=1 // pred_check
      _
    $region47: #{aeln_forward.1} parent=1 // pred_check_branch
      %126 = sbr.rel (0) target = $region49
    $region48: #{aeln_forward.1} parent=1 // pred_region
      %128 = dma.done [#allocation3], 128
    $region49: #{aeln_forward.1} parent=1 // pred_fallthru
      _
    // Predicated region
    $region50: #{aeln_forward.1} parent=1 // pred_check
      _
    $region51: #{aeln_forward.1} parent=1 // pred_check_branch
      %130 = sbr.rel (0) target = $region53
    $region52: #{aeln_forward.1} parent=1 // pred_region
      %132 = dma.done [#allocation5], 128
    $region53: #{aeln_forward.1} parent=1 // pred_fallthru
      _
    // Predicated region
    $region54: #{aeln_forward.1} parent=1 // pred_check
      _
    $region55: #{aeln_forward.1} parent=1 // pred_check_branch
      %134 = sbr.rel (0) target = $region57
    $region56: #{aeln_forward.1} parent=1 // pred_region
      %136 = dma.done [#allocation5], 256
    $region57: #{aeln_forward.1} parent=1 // pred_fallthru
      _
    // Predicated region
    $region58: #{aeln_forward.1} parent=1 // pred_check
      _
    $region59: #{aeln_forward.1} parent=1 // pred_check_branch
      %138 = sbr.rel (0) target = $region61
    $region60: #{aeln_forward.1} parent=1 // pred_region
      %140 = dma.done [#allocation8], 256
    $region61: #{aeln_forward.1} parent=1 // pred_fallthru
      _
    // Predicated region
    $region62: #{aeln_forward.1} parent=1 // pred_check
      _
    $region63: #{aeln_forward.1} parent=1 // pred_check_branch
      %142 = sbr.rel (0) target = $region65
    $region64: #{aeln_forward.1} parent=1 // pred_region
      %144 = dma.done [#allocation8], 16
    $region65: #{aeln_forward.1} parent=1 // pred_fallthru
      _
    // Predicated region
    $region66: #{aeln_forward.1} parent=1 // pred_check
      _
    $region67: #{aeln_forward.1} parent=1 // pred_check_branch
      %146 = sbr.rel (0) target = $region69
    $region68: #{aeln_forward.1} parent=1 // pred_region
      %148 = dma.done [#allocation11], 1024
    $region69: #{aeln_forward.1} parent=1 // pred_fallthru
      _
    // Predicated region
    $region70: #{aeln_forward.1} parent=1 // pred_check
      _
    $region71: #{aeln_forward.1} parent=1 // pred_check_branch
      %150 = sbr.rel (0) target = $region73
    $region72: #{aeln_forward.1} parent=1 // pred_region
      %152 = dma.done [#allocation11], 256
    $region73: #{aeln_forward.1} parent=1 // pred_fallthru
      _
    // Predicated region
    $region74: #{aeln_forward.1} parent=1 // pred_check
      _
    $region75: #{aeln_forward.1} parent=1 // pred_check_branch
      %154 = sbr.rel (0) target = $region77
    $region76: #{aeln_forward.1} parent=1 // pred_region
      %156 = dma.done [#allocation14], 1024
    $region77: #{aeln_forward.1} parent=1 // pred_fallthru
      _
    %v158 = vld [vmem:[#allocation4] sm:$0xff]
    %160 = vrot.lane.b32.xlu0 %v158, 96
    %v161 = vpop.permute.xlu0 %160
    %v163 = vpack.c.bf16 %v161, %v158
    %v164 = vld [vmem:[#allocation7] sm:$0xf]
    %v165 = vld [vmem:[#allocation7 + $0x4] sm:$0xf]
    %v166 = vld [vmem:[#allocation7 + $0x8] sm:$0xf]
    %v167 = vld [vmem:[#allocation7 + $0xc] sm:$0xf]
    %v168 = vld [vmem:[#allocation9] sm:$0x1]
    %v170 = vperm.slane %v168, 0
    %v176 = vunpack.c.l.b16 %v164
    %v177 = vunpack.c.l.b16 %v165
    %v178 = vunpack.c.l.b16 %v166
    %v179 = vunpack.c.l.b16 %v167
    %v180 = vpack.c.b16 %v177, %v176
    %v181 = vpack.c.b16 %v179, %v178
    %vm184 = vcmask 261120
    %v186 = vsel %vm184, %v163, 0
    %188 = vmatpush.bf16.msra.mxu0 0
    %189 = vmatpush.bf16.msra.mxu0 0
    %190 = vmatpush.bf16.msra.mxu0 0
    %191 = vmatpush.bf16.msra.mxu0 0
    %192 = vmatpush.bf16.msra.mxu0 0
    %193 = vmatpush.bf16.msra.mxu0 0
    %194 = vmatpush.bf16.msra.mxu0 %v181
    %195 = vmatpush.bf16.msra.mxu0 %v180
    %196 = vmatmul.bf16.gmra.mxu0 %v186
    %v197 = vpop.f32.mrf.mxu0
    %v198 = vadd.f32 %v170, %v197
    %v199 = vpop.f32.mrf.mxu0
    %v200 = vadd.f32 %v170, %v199
    %201 = vdwg.mxu0
    %v202 = vmax.f32 %v198, 0.0
    %v203 = vmax.f32 %v200, 0.0
    %v204 = vpack.c.bf16 %v203, %v202
    %v205 = vld [vmem:[#allocation10] sm:$0xf]
    %v206 = vld [vmem:[#allocation10 + $0x4] sm:$0xf]
    %v207 = vld [vmem:[#allocation10 + $0x8] sm:$0xf]
    %v208 = vld [vmem:[#allocation10 + $0xc] sm:$0xf]
    %v209 = vld [vmem:[#allocation10 + $0x10] sm:$0xf]
    %v210 = vld [vmem:[#allocation10 + $0x14] sm:$0xf]
    %v211 = vld [vmem:[#allocation10 + $0x18] sm:$0xf]
    %v212 = vld [vmem:[#allocation10 + $0x1c] sm:$0xf]
    %v213 = vld [vmem:[#allocation10 + $0x20] sm:$0xf]
    %v214 = vld [vmem:[#allocation10 + $0x24] sm:$0xf]
    %v215 = vld [vmem:[#allocation10 + $0x28] sm:$0xf]
    %v216 = vld [vmem:[#allocation10 + $0x2c] sm:$0xf]
    %v217 = vld [vmem:[#allocation10 + $0x30] sm:$0xf]
    %v218 = vld [vmem:[#allocation10 + $0x34] sm:$0xf]
    %v219 = vld [vmem:[#allocation10 + $0x38] sm:$0xf]
    %v220 = vld [vmem:[#allocation10 + $0x3c] sm:$0xf]
    %v221 = vld [vmem:[%s6] sm:$0x1]
    %v223 = vperm.slane %v221, 0
    %v241 = vunpack.c.l.b16 %v205
    %v242 = vunpack.c.l.b16 %v206
    %v243 = vunpack.c.l.b16 %v207
    %v244 = vunpack.c.l.b16 %v208
    %v245 = vunpack.c.l.b16 %v209
    %v246 = vunpack.c.l.b16 %v210
    %v247 = vunpack.c.l.b16 %v211
    %v248 = vunpack.c.l.b16 %v212
    %v249 = vunpack.c.l.b16 %v213
    %v250 = vunpack.c.l.b16 %v214
    %v251 = vunpack.c.l.b16 %v215
    %v252 = vunpack.c.l.b16 %v216
    %v253 = vunpack.c.l.b16 %v217
    %v254 = vunpack.c.l.b16 %v218
    %v255 = vunpack.c.l.b16 %v219
    %v256 = vunpack.c.l.b16 %v220
    %v257 = vpack.c.b16 %v242, %v241
    %v258 = vpack.c.b16 %v244, %v243
    %v259 = vpack.c.b16 %v246, %v245
    %v260 = vpack.c.b16 %v248, %v247
    %v261 = vpack.c.b16 %v250, %v249
    %v262 = vpack.c.b16 %v252, %v251
    %v263 = vpack.c.b16 %v254, %v253
    %v264 = vpack.c.b16 %v256, %v255
    %273 = vmatpush.bf16.msra.mxu0 %v264
    %274 = vmatpush.bf16.msra.mxu0 %v263
    %275 = vmatpush.bf16.msra.mxu0 %v262
    %276 = vmatpush.bf16.msra.mxu0 %v261
    %277 = vmatpush.bf16.msra.mxu0 %v260
    %278 = vmatpush.bf16.msra.mxu0 %v259
    %279 = vmatpush.bf16.msra.mxu0 %v258
    %280 = vmatpush.bf16.msra.mxu0 %v257
    %281 = vmatmul.bf16.gmra.mxu0 %v204
    %v282 = vpop.f32.mrf.mxu0
    %v283 = vadd.f32 %v223, %v282
    %v284 = vpop.f32.mrf.mxu0
    %v285 = vadd.f32 %v223, %v284
    %286 = vdwg.mxu0
    %v287 = vld [vmem:[#allocation2] sm:$0xff]
    %289 = vrot.lane.b32.xlu0 %v287, 96
    %v290 = vpop.permute.xlu0 %289
    %v292 = vpack.c.bf16 %v290, %v287
    %v293 = vld [vmem:[#allocation6] sm:$0xf]
    %v294 = vld [vmem:[#allocation6 + $0x4] sm:$0xf]
    %v295 = vld [vmem:[#allocation6 + $0x8] sm:$0xf]
    %v296 = vld [vmem:[#allocation6 + $0xc] sm:$0xf]
    %v301 = vunpack.c.l.b16 %v293
    %v302 = vunpack.c.l.b16 %v294
    %v303 = vunpack.c.l.b16 %v295
    %v304 = vunpack.c.l.b16 %v296
    %v305 = vpack.c.b16 %v302, %v301
    %v306 = vpack.c.b16 %v304, %v303
    %v310 = vsel %vm184, %v292, 0
    %312 = vmatpush.bf16.msra.mxu0 0
    %313 = vmatpush.bf16.msra.mxu0 0
    %314 = vmatpush.bf16.msra.mxu0 0
    %315 = vmatpush.bf16.msra.mxu0 0
    %316 = vmatpush.bf16.msra.mxu0 0
    %317 = vmatpush.bf16.msra.mxu0 0
    %318 = vmatpush.bf16.msra.mxu0 %v306
    %319 = vmatpush.bf16.msra.mxu0 %v305
    %320 = vmatmul.bf16.gmra.mxu0 %v310
    %v321 = vpop.f32.mrf.mxu0
    %v322 = vadd.f32 0.0, %v321
    %v323 = vpop.f32.mrf.mxu0
    %v324 = vadd.f32 0.0, %v323
    %325 = vdwg.mxu0
    %326 = vmatpush.xpose.msra.mxu0 0.0
    %327 = vmatpush.xpose.msra.mxu0 0.0
    %328 = vmatpush.xpose.msra.mxu0 0.0
    %329 = vmatpush.xpose.msra.mxu0 0.0
    %330 = vmatpush.xpose.msra.mxu0 0.0
    %331 = vmatpush.xpose.msra.mxu0 0.0
    %332 = vmatpush.xpose.msra.mxu0 0.0
    %333 = vmatpush.xpose.msra.mxu0 0.0
    %334 = vmatpush.xpose.msra.mxu0 0.0
    %335 = vmatpush.xpose.msra.mxu0 0.0
    %336 = vmatpush.xpose.msra.mxu0 0.0
    %337 = vmatpush.xpose.msra.mxu0 0.0
    %338 = vmatpush.xpose.msra.mxu0 0.0
    %339 = vmatpush.xpose.msra.mxu0 0.0
    %340 = vmatpush.xpose.msra.mxu0 0.0
    %341 = vmatpush.xpose.msra.mxu0 %v283
    %342 = vmatmul.f32.gmra.mxu0 %v322
    %v343 = vpop.f32.mrf.mxu0
    %v344 = vadd.f32 0.0, %v343
    %345 = vdwg.mxu0
    %vm346 = vcmask 64512
    %v347 = vsel %vm346, %v344, -inf
    %348 = vmax.xlane.f32.xlu0 %v347
    %v349 = vpop.xlane.xlu0 %348
    %v350 = vsub.f32 %v344, %v349
    %v351 = vmul.f32 %v350, 1.442695
    %v352 = vpow.pop %v351
    %v353 = vsel %vm346, %v352, 0.0
    %354 = vadd.xlane.f32.xlu0 %v353
    %v355 = vpop.xlane.xlu0 %354
    %v356 = vrcp.pop %v355
    %v357 = vmul.f32 %v352, %v356
    %v359 = vsel %vm346, %v357, 0
    %361 = vmatpush.msra.mxu0 0.0
    %362 = vmatpush.msra.mxu0 0.0
    %363 = vmatpush.msra.mxu0 0.0
    %364 = vmatpush.msra.mxu0 0.0
    %365 = vmatpush.msra.mxu0 0.0
    %366 = vmatpush.msra.mxu0 0.0
    %367 = vmatpush.msra.mxu0 0.0
    %368 = vmatpush.msra.mxu0 0.0
    %369 = vmatpush.msra.mxu0 0.0
    %370 = vmatpush.msra.mxu0 0.0
    %371 = vmatpush.msra.mxu0 0.0
    %372 = vmatpush.msra.mxu0 0.0
    %373 = vmatpush.msra.mxu0 0.0
    %374 = vmatpush.msra.mxu0 0.0
    %375 = vmatpush.msra.mxu0 0.0
    %376 = vmatpush.msra.mxu0 %v158
    %377 = vmatmul.f32.gmra.mxu0 %v359
    %v378 = vpop.f32.mrf.mxu0
    %v379 = vadd.f32 0.0, %v378
    %380 = vdwg.mxu0
    %381 = vmatpush.xpose.msra.mxu0 0.0
    %382 = vmatpush.xpose.msra.mxu0 0.0
    %383 = vmatpush.xpose.msra.mxu0 0.0
    %384 = vmatpush.xpose.msra.mxu0 0.0
    %385 = vmatpush.xpose.msra.mxu0 0.0
    %386 = vmatpush.xpose.msra.mxu0 0.0
    %387 = vmatpush.xpose.msra.mxu0 0.0
    %388 = vmatpush.xpose.msra.mxu0 0.0
    %389 = vmatpush.xpose.msra.mxu0 0.0
    %390 = vmatpush.xpose.msra.mxu0 0.0
    %391 = vmatpush.xpose.msra.mxu0 0.0
    %392 = vmatpush.xpose.msra.mxu0 0.0
    %393 = vmatpush.xpose.msra.mxu0 0.0
    %394 = vmatpush.xpose.msra.mxu0 0.0
    %395 = vmatpush.xpose.msra.mxu0 0.0
    %396 = vmatpush.xpose.msra.mxu0 %v285
    %397 = vmatmul.f32.gmra.mxu0 %v324
    %v398 = vpop.f32.mrf.mxu0
    %v399 = vadd.f32 0.0, %v398
    %400 = vdwg.mxu0
    %v401 = vsel %vm346, %v399, -inf
    %402 = vmax.xlane.f32.xlu0 %v401
    %v403 = vpop.xlane.xlu0 %402
    %v404 = vsub.f32 %v399, %v403
    %v405 = vmul.f32 %v404, 1.442695
    %v406 = vpow.pop %v405
    %v407 = vsel %vm346, %v406, 0.0
    %408 = vadd.xlane.f32.xlu0 %v407
    %v409 = vpop.xlane.xlu0 %408
    %v410 = vrcp.pop %v409
    %v411 = vmul.f32 %v406, %v410
    %v413 = vsel %vm346, %v411, 0
    %415 = vmatpush.msra.mxu0 0.0
    %416 = vmatpush.msra.mxu0 0.0
    %417 = vmatpush.msra.mxu0 0.0
    %418 = vmatpush.msra.mxu0 0.0
    %419 = vmatpush.msra.mxu0 0.0
    %420 = vmatpush.msra.mxu0 0.0
    %421 = vmatpush.msra.mxu0 0.0
    %422 = vmatpush.msra.mxu0 0.0
    %423 = vmatpush.msra.mxu0 0.0
    %424 = vmatpush.msra.mxu0 0.0
    %425 = vmatpush.msra.mxu0 0.0
    %426 = vmatpush.msra.mxu0 0.0
    %427 = vmatpush.msra.mxu0 0.0
    %428 = vmatpush.msra.mxu0 0.0
    %429 = vmatpush.msra.mxu0 0.0
    %430 = vmatpush.msra.mxu0 %v161
    %431 = vmatmul.f32.gmra.mxu0 %v413
    %v432 = vpop.f32.mrf.mxu0
    %v433 = vadd.f32 0.0, %v432
    %434 = vdwg.mxu0
    %v435 = vpack.c.bf16 %v433, %v379
    %v436 = vld [vmem:[#allocation12] sm:$0xf]
    %v437 = vld [vmem:[#allocation12 + $0x4] sm:$0xf]
    %v438 = vld [vmem:[#allocation12 + $0x8] sm:$0xf]
    %v439 = vld [vmem:[#allocation12 + $0xc] sm:$0xf]
    %v440 = vld [vmem:[%s8] sm:$0x1]
    %v442 = vperm.slane %v440, 0
    %v448 = vunpack.c.l.b16 %v436
    %v449 = vunpack.c.l.b16 %v437
    %v450 = vunpack.c.l.b16 %v438
    %v451 = vunpack.c.l.b16 %v439
    %v452 = vpack.c.b16 %v449, %v448
    %v453 = vpack.c.b16 %v451, %v450
    %v457 = vsel %vm184, %v435, 0
    %459 = vmatpush.bf16.msra.mxu0 0
    %460 = vmatpush.bf16.msra.mxu0 0
    %461 = vmatpush.bf16.msra.mxu0 0
    %462 = vmatpush.bf16.msra.mxu0 0
    %463 = vmatpush.bf16.msra.mxu0 0
    %464 = vmatpush.bf16.msra.mxu0 0
    %465 = vmatpush.bf16.msra.mxu0 %v453
    %466 = vmatpush.bf16.msra.mxu0 %v452
    %467 = vmatmul.bf16.gmra.mxu0 %v457
    %v468 = vpop.f32.mrf.mxu0
    %v469 = vadd.f32 %v442, %v468
    %v470 = vpop.f32.mrf.mxu0
    %v471 = vadd.f32 %v442, %v470
    %472 = vdwg.mxu0
    %vm473 = vcmp.ge.f32.partialorder %v469, 0.0
    %vm474 = vcmp.ge.f32.partialorder %v471, 0.0
    %v475 = vmul.f32 %v469, 0.01
    %v476 = vmul.f32 %v471, 0.01
    %v477 = vsel %vm473, %v469, %v475
    %v478 = vsel %vm474, %v471, %v476
    %v479 = vpack.c.bf16 %v478, %v477
    %v480 = vld [vmem:[#allocation13] sm:$0xf]
    %v481 = vld [vmem:[#allocation13 + $0x4] sm:$0xf]
    %v482 = vld [vmem:[#allocation13 + $0x8] sm:$0xf]
    %v483 = vld [vmem:[#allocation13 + $0xc] sm:$0xf]
    %v484 = vld [vmem:[#allocation13 + $0x10] sm:$0xf]
    %v485 = vld [vmem:[#allocation13 + $0x14] sm:$0xf]
    %v486 = vld [vmem:[#allocation13 + $0x18] sm:$0xf]
    %v487 = vld [vmem:[#allocation13 + $0x1c] sm:$0xf]
    %v488 = vld [vmem:[#allocation13 + $0x20] sm:$0xf]
    %v489 = vld [vmem:[#allocation13 + $0x24] sm:$0xf]
    %v490 = vld [vmem:[#allocation13 + $0x28] sm:$0xf]
    %v491 = vld [vmem:[#allocation13 + $0x2c] sm:$0xf]
    %v492 = vld [vmem:[#allocation13 + $0x30] sm:$0xf]
    %v493 = vld [vmem:[#allocation13 + $0x34] sm:$0xf]
    %v494 = vld [vmem:[#allocation13 + $0x38] sm:$0xf]
    %v495 = vld [vmem:[#allocation13 + $0x3c] sm:$0xf]
    %v496 = vld [vmem:[%s10] sm:$0x1]
    %v498 = vperm.slane %v496, 0
    %v516 = vunpack.c.l.b16 %v480
    %v517 = vunpack.c.l.b16 %v481
    %v518 = vunpack.c.l.b16 %v482
    %v519 = vunpack.c.l.b16 %v483
    %v520 = vunpack.c.l.b16 %v484
    %v521 = vunpack.c.l.b16 %v485
    %v522 = vunpack.c.l.b16 %v486
    %v523 = vunpack.c.l.b16 %v487
    %v524 = vunpack.c.l.b16 %v488
    %v525 = vunpack.c.l.b16 %v489
    %v526 = vunpack.c.l.b16 %v490
    %v527 = vunpack.c.l.b16 %v491
    %v528 = vunpack.c.l.b16 %v492
    %v529 = vunpack.c.l.b16 %v493
    %v530 = vunpack.c.l.b16 %v494
    %v531 = vunpack.c.l.b16 %v495
    %v532 = vpack.c.b16 %v517, %v516
    %v533 = vpack.c.b16 %v519, %v518
    %v534 = vpack.c.b16 %v521, %v520
    %v535 = vpack.c.b16 %v523, %v522
    %v536 = vpack.c.b16 %v525, %v524
    %v537 = vpack.c.b16 %v527, %v526
    %v538 = vpack.c.b16 %v529, %v528
    %v539 = vpack.c.b16 %v531, %v530
    %548 = vmatpush.bf16.msra.mxu0 %v539
    %549 = vmatpush.bf16.msra.mxu0 %v538
    %550 = vmatpush.bf16.msra.mxu0 %v537
    %551 = vmatpush.bf16.msra.mxu0 %v536
    %552 = vmatpush.bf16.msra.mxu0 %v535
    %553 = vmatpush.bf16.msra.mxu0 %v534
    %554 = vmatpush.bf16.msra.mxu0 %v533
    %555 = vmatpush.bf16.msra.mxu0 %v532
    %556 = vmatmul.bf16.gmra.mxu0 %v479
    %v557 = vpop.f32.mrf.mxu0
    %v558 = vadd.f32 %v498, %v557
    %v559 = vpop.f32.mrf.mxu0
    %v560 = vadd.f32 %v498, %v559
    %561 = vdwg.mxu0
    %v562 = vmul.f32 %v558, %v560
    %563 = vadd.xlane.f32.xlu0 %v562
    %v564 = vpop.xlane.xlu0 %563
    %v565 = vmul.f32 %v558, %v558
    %566 = vadd.xlane.f32.xlu0 %v565
    %v567 = vpop.xlane.xlu0 %566
    %v568 = vmul.f32 %v560, %v560
    %569 = vadd.xlane.f32.xlu0 %v568
    %v570 = vpop.xlane.xlu0 %569
    %v571 = vmax.f32 %v567, 1e-16
    %v572 = vrsqrt.pop %v571
    %v573 = vmul.f32 %v572, %v571
    %v574 = vmul.f32 %v573, %v572
    %v575 = vmul.f32 0.5, %v574
    %v576 = vsub.f32 1.5, %v575
    %v577 = vmul.f32 %v572, %v576
    %vm578 = vweird.f32 %v571
    %vm579 = vweird.f32 %v572
    %vm580 = vmor %vm578, %vm579
    %v581 = vsel %vm580, %v572, %v577
    %v582 = vmax.f32 %v570, 1e-16
    %v583 = vrsqrt.pop %v582
    %v584 = vmul.f32 %v583, %v582
    %v585 = vmul.f32 %v584, %v583
    %v586 = vmul.f32 0.5, %v585
    %v587 = vsub.f32 1.5, %v586
    %v588 = vmul.f32 %v583, %v587
    %vm589 = vweird.f32 %v582
    %vm590 = vweird.f32 %v583
    %vm591 = vmor %vm589, %vm590
    %v592 = vsel %vm591, %v583, %v588
    %v593 = vmul.f32 %v564, %v581
    %v594 = vmul.f32 %v593, %v592
    %v595 = vadd.f32 %v594, 1.0
    %v596 = vmul.f32 %v595, 0.5
    %597 = vst [vmem:[%s11] sm:$0xff] %v596
    // Predicated region
    $region78: #{aeln_forward.1} parent=1 // pred_check
      _
    $region79: #{aeln_forward.1} parent=1 // pred_check_branch
      %599 = sbr.rel (0) target = $region81
    $region80: #{aeln_forward.1} parent=1 // pred_region
      _
    $region81: #{aeln_forward.1} parent=1 // pred_fallthru
      _
    // Predicated region
    $region82: #{aeln_forward.1} parent=1 // pred_check
      _
    $region83: #{aeln_forward.1} parent=1 // pred_check_branch
      %601 = sbr.rel (0) target = $region85
    $region84: #{aeln_forward.1} parent=1 // pred_region
      _
    $region85: #{aeln_forward.1} parent=1 // pred_fallthru
      _
    %602 = vsyncpa [#allocation3], 1
    %603 = vsyncpa [#allocation5], 1
    %604 = vsyncpa [#allocation8], 1
    %605 = vsyncpa [#allocation11], 1
    %606 = vsyncpa [#allocation14], 1

</llo_original>
